<compile_context>
chip_gen: v6e
topology: v6e:2x2x1
jax: 0.10.0
libtpu: 0.0.40
codegen_flags: <defaults>
</compile_context>

<pallas_src>
import math
import numpy as np
import jax
import jax.numpy as jnp
from jax import lax
from jax.experimental import pallas as pl
from jax.experimental.pallas import tpu as pltpu


# -----------------------------------------------------------------------------
# small helpers
# -----------------------------------------------------------------------------
def _round_up(x, m):
    return (x + m - 1) // m * m


def _pad_last(x, to):
    pad = to - x.shape[-1]
    if pad <= 0:
        return x
    return jnp.pad(x, [(0, 0)] * (x.ndim - 1) + [(0, pad)])


def _pad_rows(x, to):
    pad = to - x.shape[0]
    if pad <= 0:
        return x
    return jnp.pad(x, [(0, pad)] + [(0, 0)] * (x.ndim - 1))


def _batch_tiles(B, block_b):
    """Batch padding + tile size.

    16-row granularity (native bf16 sublane tile).  The tile is capped at
    ceil(Bp/2) so that whenever B allows it the grid has >=2 programs and the
    ("parallel",) axis can be sharded across the two v7x TensorCores.
    """
    Bp = _round_up(max(B, 1), 16)
    half = _round_up((Bp + 1) // 2, 16)
    tb = max(16, min(_round_up(block_b, 16), half))
    Bp = _round_up(Bp, tb)
    return Bp, tb


# -----------------------------------------------------------------------------
# Pallas kernels
# -----------------------------------------------------------------------------
def _make_course_kernel(T, U, A, D, Hp):
    """T edge types, U type-embedding size, A attention dim, D descrip dim,
    Hp padded hidden.  Streamed input is one bf16 slab [descrip | cte | onehot]."""

    def kernel(slab_ref,     # (tb, D + T*U + T)  bf16
               wfused_ref,   # (D, Hp+Ep)  bf16  [course_h1.W | course_trans] (zero padded)
               bfused_ref,   # (1, Hp+Ep)  f32   [course_h1.b | 0]
               w2_ref,       # (Hp, Ep)    bf16  course_h2.W (zero padded)
               b2_ref,       # (1, Ep)     f32   course_h2.b (zero padded)
               ws1_ref,      # (U, T*A)    bf16  trans_weights_s1 stacked on columns
               ws2bd_ref,    # (T*A, T)    bf16  block-diagonal trans_weights_s2
               wc_ref,       # (T*U, Ep)   bf16  trans_weights_c stacked on rows (padded)
               out_ref):     # (tb, Ep)    bf16
        bf16 = jnp.bfloat16
        f32 = jnp.float32

        slab = slab_ref[...]                                      # bf16
        x = slab[:, 0:D]                                          # (tb, D)   bf16
        cte_bf = slab[:, D:D + T * U]                             # (tb, T*U) bf16
        cte = cte_bf.astype(f32)
        onehot = slab[:, D + T * U:D + T * U + T].astype(f32)     # (tb, T)

        # fused shared-LHS matmul: [h1 | course_trans] -------------------------
        fused = jnp.dot(x, wfused_ref[...],
                        preferred_element_type=f32) + bfused_ref[...]
        h = jnp.maximum(fused[:, :Hp], 0.0)                        # ReLU(course_h1(x))
        cde = fused[:, Hp:]                                        # course_des_embed
        ce = jnp.dot(h.astype(bf16), w2_ref[...],
                     preferred_element_type=f32) + b2_ref[...]

        ws1 = ws1_ref[...]                                         # (U, T*A) bf16
        ws2bd = ws2bd_ref[...]                                     # (T*A, T) bf16

        # attention scores: all-type matmul + one-hot column select ------------
        scores = []
        for t in range(T):                                         # aggregation type
            act = jnp.tanh(jnp.dot(cte_bf[:, t * U:(t + 1) * U], ws1,
                                   preferred_element_type=f32))    # (tb, T*A)
            sall = jnp.dot(act.astype(bf16), ws2bd,
                           preferred_element_type=f32)             # (tb, T)
            scores.append(jnp.sum(sall * onehot, axis=1, keepdims=True))  # (tb, 1)

        # softmax over the T edge types
        m = scores[0]
        for t in range(1, T):
            m = jnp.maximum(m, scores[t])
        exps = [jnp.exp(s - m) for s in scores]
        denom = exps[0]
        for t in range(1, T):
            denom = denom + exps[t]
        inv = pl.reciprocal(denom, approx=True)

        # attention-weighted type embedding -> (tb, U)
        agg = (exps[0] * inv) * cte[:, 0:U]
        for t in range(1, T):
            agg = agg + (exps[t] * inv) * cte[:, t * U:(t + 1) * U]

        # per-example trans_w projection: one-hot masked K=T*U matmul ----------
        sel_all = jnp.concatenate(
            [onehot[:, t:t + 1] * agg for t in range(T)], axis=1)  # (tb, T*U)
        add = jnp.dot(sel_all.astype(bf16), wc_ref[...],
                      preferred_element_type=f32)                  # (tb, Ep)

        out = ce + add + cde                                       # padded cols are 0
        ss = jnp.sum(out * out, axis=1, keepdims=True)
        # F.normalize: x / max(||x||, 1e-12) == x * rsqrt(max(ss, 1e-24))
        out_ref[...] = (out * lax.rsqrt(jnp.maximum(ss, 1e-24))).astype(out_ref.dtype)

    return kernel


def _make_student_kernel(T, U):
    def kernel(stu_ref,    # (tb, Ep)  bf16  student_embeddings[train_inputs] (padded)
               cte_ref,    # (tb, T*U) bf16  neighbor type-mean
               tw_ref,     # (U, Ep)   bf16  trans_weights_s[0] (padded)
               out_ref):   # (tb, Ep)  bf16
        f32 = jnp.float32
        se = stu_ref[...].astype(f32)
        cte = cte_ref[...].astype(f32)
        ste = cte[:, 0:U]
        for t in range(1, T):
            ste = ste + cte[:, t * U:(t + 1) * U]
        ste = ste * (1.0 / T)                                      # mean over edge types
        add = jnp.dot(ste.astype(jnp.bfloat16), tw_ref[...],
                      preferred_element_type=f32)
        out = se + add
        ss = jnp.sum(out * out, axis=1, keepdims=True)
        out_ref[...] = (out * lax.rsqrt(jnp.maximum(ss, 1e-24))).astype(out_ref.dtype)

    return kernel


# -----------------------------------------------------------------------------
# wrappers (weight packing + batch-tiled pallas_call)
# -----------------------------------------------------------------------------
_COMPILER_PARAMS = pltpu.CompilerParams(
    dimension_semantics=("parallel",),          # shards grid across TCs on v7x
    vmem_limit_bytes=32 * 1024 * 1024)          # safe w.r.t. v7x's 64 MiB VMEM


def course_forward_pallas(descrip, w1, b1, w2, b2, ctrans,
                          cte_flat, train_types,
                          trans_w_c, trans_w_s1, trans_w_s2,
                          *, block_b=512):
    B, D = descrip.shape
    T, U, A = trans_w_s1.shape
    assert trans_w_s2.shape == (T, A, 1), "trans_weights_s2 must have trailing dim 1"
    H = w1.shape[1]
    E = w2.shape[1]
    Hp = _round_up(H, 128)
    Ep = _round_up(E, 128)
    f32 = jnp.float32
    bf16 = jnp.bfloat16

    # --- constant weight packing (bf16 MXU operands; biases stay f32) ---
    wfused = jnp.concatenate([_pad_last(w1.astype(f32), Hp),
                              _pad_last(ctrans.astype(f32), Ep)],
                             axis=1).astype(bf16)                           # (D, Hp+Ep)
    bfused = jnp.concatenate([_pad_last(b1.astype(f32), Hp),
                              jnp.zeros((1, Ep), f32)], axis=1)             # (1, Hp+Ep)
    w2p = jnp.pad(w2.astype(f32), ((0, Hp - H), (0, Ep - E))).astype(bf16)  # (Hp, Ep)
    b2p = _pad_last(b2.astype(f32), Ep)                                     # (1, Ep)
    ws1_stack = jnp.transpose(trans_w_s1.astype(f32),
                              (1, 0, 2)).reshape(U, T * A).astype(bf16)     # (U, T*A)
    ws2_2d = trans_w_s2.astype(f32)[:, :, 0]                                # (T, A)
    ws2_bd = (jnp.eye(T, dtype=f32)[:, None, :] *
              ws2_2d[:, :, None]).reshape(T * A, T).astype(bf16)            # (T*A, T)
    wc_stack = _pad_last(trans_w_c.astype(f32), Ep).reshape(T * U, Ep).astype(bf16)

    onehot = jax.nn.one_hot(train_types, T, dtype=f32)                      # (B, T)

    # --- single streamed slab: [descrip | cte | onehot], bf16 ---
    slab = jnp.concatenate([descrip.astype(f32), cte_flat.astype(f32), onehot],
                           axis=1).astype(bf16)                             # (B, W)
    W = D + T * U + T

    Bp, tb = _batch_tiles(B, block_b)
    slab = _pad_rows(slab, Bp)

    def batch_spec(cols):
        return pl.BlockSpec((tb, cols), lambda i: (i, 0))

    def const_spec(shape):
        return pl.BlockSpec(shape, lambda i: (0, 0))

    out = pl.pallas_call(
        _make_course_kernel(T, U, A, D, Hp),
        out_shape=jax.ShapeDtypeStruct((Bp, Ep), bf16),
        grid=(Bp // tb,),
        in_specs=[
            batch_spec(W),                # streamed slab
            const_spec((D, Hp + Ep)),     # fused [W1 | course_trans]
            const_spec((1, Hp + Ep)),     # fused bias
            const_spec((Hp, Ep)),         # W2
            const_spec((1, Ep)),          # b2
            const_spec((U, T * A)),       # Ws1 stacked
            const_spec((T * A, T)),       # Ws2 block-diagonal
            const_spec((T * U, Ep)),      # Wc stacked
        ],
        out_specs=pl.BlockSpec((tb, Ep), lambda i: (i, 0)),
        compiler_params=_COMPILER_PARAMS,
    )(slab, wfused, bfused, w2p, b2p, ws1_stack, ws2_bd, wc_stack)
    return out[:B, :E].astype(f32)


def student_forward_pallas(stu_embed, cte_flat, trans_w_s0, *, block_b=512):
    B, E = stu_embed.shape
    U = trans_w_s0.shape[0]
    T = cte_flat.shape[1] // U
    Ep = _round_up(E, 128)
    f32 = jnp.float32
    bf16 = jnp.bfloat16

    stu_p = _pad_last(stu_embed.astype(f32), Ep).astype(bf16)
    tw_p = _pad_last(trans_w_s0.astype(f32), Ep).astype(bf16)
    cte_p = cte_flat.astype(bf16)

    Bp, tb = _batch_tiles(B, block_b)
    stu_p = _pad_rows(stu_p, Bp)
    cte_p = _pad_rows(cte_p, Bp)

    out = pl.pallas_call(
        _make_student_kernel(T, U),
        out_shape=jax.ShapeDtypeStruct((Bp, Ep), bf16),
        grid=(Bp // tb,),
        in_specs=[
            pl.BlockSpec((tb, Ep), lambda i: (i, 0)),
            pl.BlockSpec((tb, T * U), lambda i: (i, 0)),
            pl.BlockSpec((U, Ep), lambda i: (0, 0)),
        ],
        out_specs=pl.BlockSpec((tb, Ep), lambda i: (i, 0)),
        compiler_params=_COMPILER_PARAMS,
    )(stu_p, cte_p, tw_p)
    return out[:B, :E].astype(f32)


# -----------------------------------------------------------------------------
# glue: data-dependent gathers (kept in plain JAX / XLA)
# -----------------------------------------------------------------------------
def neigh_type_mean(node_neigh, table):
    """node_neigh: (B, T, N) int32; table: (T, n_rows, U) built once.
    Fused gather + mean over neighbor samples -> (B, T*U)."""
    B, T, N = node_neigh.shape
    outs = []
    for t in range(T):
        rows = table[t][node_neigh[:, t].reshape(-1)]          # (B*N, U)
        outs.append(rows.reshape(B, N, -1).mean(axis=1))       # (B, U)
    return jnp.concatenate(outs, axis=1)                       # (B, T*U)


def gather_neighbors_full(node_neigh, table):
    """Reference-only: full (B, T, N, U) gathered neighbor embeddings."""
    B, T, N = node_neigh.shape
    outs = [table[t][node_neigh[:, t].reshape(-1)].reshape(B, N, -1)
            for t in range(T)]
    return jnp.stack(outs, axis=1)


# -----------------------------------------------------------------------------
# pure-JAX references (mirror the PyTorch module, full f32)
# -----------------------------------------------------------------------------
def course_forward_ref(descrip, w1, b1, w2, b2, ctrans, neigh4, train_types,
                       trans_w_c, trans_w_s1, trans_w_s2):
    h = jax.nn.relu(descrip @ w1 + b1)
    ce = h @ w2 + b2
    cde = descrip @ ctrans
    cte = jnp.mean(neigh4, axis=2)
    tw = trans_w_c[train_types]
    tws1 = trans_w_s1[train_types]
    tws2 = trans_w_s2[train_types][:, :, 0]
    t = jnp.tanh(jnp.einsum('btu,bua->bta', cte, tws1))
    scores = jnp.einsum('bta,ba->bt', t, tws2)
    attn = jax.nn.softmax(scores, axis=1)
    agg = jnp.einsum('bt,btu->bu', attn, cte)
    add = jnp.einsum('bu,bue->be', agg, tw)
    out = ce + add + cde
    return out / jnp.maximum(jnp.linalg.norm(out, axis=1, keepdims=True), 1e-12)


def student_forward_ref(stu, neigh4, tw):
    ste = jnp.mean(jnp.mean(neigh4, axis=2), axis=1)
    out = stu + ste @ tw
    return out / jnp.maximum(jnp.linalg.norm(out, axis=1, keepdims=True), 1e-12)


# -----------------------------------------------------------------------------
# main
# -----------------------------------------------------------------------------
if __name__ == "__main__":
    num_courses, num_students = 20, 30
    embedding_size = 32        # E
    embedding_u_size = 16      # U
    edge_type_count = 2        # T
    dim_a = 8                  # A
    dim_course_descrip = 16    # D
    hidden_size = 32           # H
    B = 8                      # batch
    N = 4                      # neighbor_samples

    key = jax.random.PRNGKey(0)
    ks = jax.random.split(key, 20)

    def unif(k, shape, lim):
        return jax.random.uniform(k, shape, jnp.float32, -lim, lim)

    # nn.Linear-style deterministic init
    w1 = unif(ks[0], (dim_course_descrip, hidden_size), 1.0 / math.sqrt(dim_course_descrip))
    b1 = unif(ks[1], (1, hidden_size), 1.0 / math.sqrt(dim_course_descrip))
    w2 = unif(ks[2], (hidden_size, embedding_size), 1.0 / math.sqrt(hidden_size))
    b2 = unif(ks[3], (1, embedding_size), 1.0 / math.sqrt(hidden_size))

    # reset_parameters()
    course_trans = unif(ks[4], (dim_course_descrip, embedding_size), 1.0)
    student_embeddings = unif(ks[5], (num_students, embedding_size), 1.0)
    course_type_embeddings = unif(ks[6], (num_courses, edge_type_count, embedding_u_size), 1.0)
    student_type_embeddings = unif(ks[7], (num_students, 1, embedding_u_size), 1.0)
    std = 1.0 / math.sqrt(embedding_size)
    trans_weights_c = jax.random.normal(ks[8], (edge_type_count, embedding_u_size, embedding_size), jnp.float32) * std
    trans_weights_s = jax.random.normal(ks[9], (1, embedding_u_size, embedding_size), jnp.float32) * std
    trans_weights_s1 = jax.random.normal(ks[10], (edge_type_count, embedding_u_size, dim_a), jnp.float32) * std
    trans_weights_s2 = jax.random.normal(ks[11], (edge_type_count, dim_a, 1), jnp.float32) * std

    # per-type lookup tables, concatenated ONCE (hoisted out of the T loop)
    stu_tab = student_type_embeddings[:, 0]                       # (nS, U)
    course_tab = jnp.swapaxes(course_type_embeddings, 0, 1)       # (T, nC, U)
    stu_tab_b = jnp.broadcast_to(stu_tab[None], (edge_type_count,) + stu_tab.shape)
    table_c = jnp.concatenate([stu_tab_b, course_tab], axis=1)    # 'c': [stu | course_i]
    table_s = jnp.concatenate([course_tab, stu_tab_b], axis=1)    # 's': [course_i | stu]

    # ---- 'c' branch ----
    course_descrip = jax.random.normal(ks[12], (B, dim_course_descrip), jnp.float32)
    train_types = jax.random.randint(ks[13], (B,), 0, edge_type_count)
    node_neigh_c = jax.random.randint(ks[14], (B, edge_type_count, N), 0, num_students + num_courses)

    cte_c = neigh_type_mean(node_neigh_c, table_c)                # (B, T*U)

    course_fwd = jax.jit(course_forward_pallas)
    out_c = course_fwd(course_descrip, w1, b1, w2, b2, course_trans,
                       cte_c, train_types,
                       trans_weights_c, trans_weights_s1, trans_weights_s2)
    out_c = jax.block_until_ready(out_c)

    neigh_c_full = gather_neighbors_full(node_neigh_c, table_c)
    with jax.default_matmul_precision("highest"):
        ref_c = course_forward_ref(course_descrip, w1, b1, w2, b2, course_trans,
                                   neigh_c_full, train_types,
                                   trans_weights_c, trans_weights_s1, trans_weights_s2)
    # bf16 MXU operands + bf16 output store -> compare at bf16-level tolerance
    np.testing.assert_allclose(np.asarray(out_c), np.asarray(ref_c), rtol=2e-2, atol=2e-2)

    # ---- 's' branch ----
    train_inputs_s = jax.random.randint(ks[15], (B,), 0, num_students)
    node_neigh_s = jax.random.randint(ks[16], (B, edge_type_count, N), 0, num_students + num_courses)

    cte_s = neigh_type_mean(node_neigh_s, table_s)                # (B, T*U)
    stu_embed = student_embeddings[train_inputs_s]                # (B, E)
    tw_s = trans_weights_s[0]                                     # (U, E)

    student_fwd = jax.jit(student_forward_pallas)
    out_s = student_fwd(stu_embed, cte_s, tw_s)
    out_s = jax.block_until_ready(out_s)

    neigh_s_full = gather_neighbors_full(node_neigh_s, table_s)
    with jax.default_matmul_precision("highest"):
        ref_s = student_forward_ref(stu_embed, neigh_s_full, tw_s)
    np.testing.assert_allclose(np.asarray(out_s), np.asarray(ref_s), rtol=2e-2, atol=2e-2)

    print("KERNEL_OK")
</pallas_src>

<mosaic_0001>
module attributes {stable_mosaic.version = 11 : i64} {
  func.func @kernel(%arg0: i32, %arg1: memref<16x50xbf16, #tpu.memory_space<vmem>>, %arg2: memref<16x256xbf16, #tpu.memory_space<vmem>>, %arg3: memref<1x256xf32, #tpu.memory_space<vmem>>, %arg4: memref<128x128xbf16, #tpu.memory_space<vmem>>, %arg5: memref<1x128xf32, #tpu.memory_space<vmem>>, %arg6: memref<16x16xbf16, #tpu.memory_space<vmem>>, %arg7: memref<16x2xbf16, #tpu.memory_space<vmem>>, %arg8: memref<32x128xbf16, #tpu.memory_space<vmem>>, %arg9: memref<16x128xbf16, #tpu.memory_space<vmem>>) attributes {dimension_semantics = [#tpu.dimension_semantics<parallel>], iteration_bounds = array<i64: 1>, scalar_prefetch = 0 : i64, scratch_operands = 0 : i64, tpu.core_type = #tpu.core_type<tc>, window_params = [{transform_indices = @transform_0, window_bounds = array<i64: 16, 50>}, {pipeline_mode = #tpu.pipeline_mode<synchronous>, transform_indices = @transform_1, window_bounds = array<i64: 16, 256>}, {pipeline_mode = #tpu.pipeline_mode<synchronous>, transform_indices = @transform_2, window_bounds = array<i64: 1, 256>}, {pipeline_mode = #tpu.pipeline_mode<synchronous>, transform_indices = @transform_3, window_bounds = array<i64: 128, 128>}, {pipeline_mode = #tpu.pipeline_mode<synchronous>, transform_indices = @transform_4, window_bounds = array<i64: 1, 128>}, {pipeline_mode = #tpu.pipeline_mode<synchronous>, transform_indices = @transform_5, window_bounds = array<i64: 16, 16>}, {pipeline_mode = #tpu.pipeline_mode<synchronous>, transform_indices = @transform_6, window_bounds = array<i64: 16, 2>}, {pipeline_mode = #tpu.pipeline_mode<synchronous>, transform_indices = @transform_7, window_bounds = array<i64: 32, 128>}, {transform_indices = @transform_8, window_bounds = array<i64: 16, 128>}]} {
    %c0 = arith.constant 0 : index
    %c0_0 = arith.constant 0 : index
    %0 = vector.load %arg1[%c0, %c0_0] : memref<16x50xbf16, #tpu.memory_space<vmem>>, vector<16x50xbf16>
    %1 = vector.extract_strided_slice %0 {offsets = [0, 0], sizes = [16, 16], strides = [1, 1]} : vector<16x50xbf16> to vector<16x16xbf16>
    %2 = vector.extract_strided_slice %0 {offsets = [0, 16], sizes = [16, 32], strides = [1, 1]} : vector<16x50xbf16> to vector<16x32xbf16>
    %3 = arith.extf %2 : vector<16x32xbf16> to vector<16x32xf32>
    %4 = vector.extract_strided_slice %0 {offsets = [0, 48], sizes = [16, 2], strides = [1, 1]} : vector<16x50xbf16> to vector<16x2xbf16>
    %5 = arith.extf %4 : vector<16x2xbf16> to vector<16x2xf32>
    %c0_1 = arith.constant 0 : index
    %c0_2 = arith.constant 0 : index
    %6 = vector.load %arg2[%c0_1, %c0_2] : memref<16x256xbf16, #tpu.memory_space<vmem>>, vector<16x256xbf16>
    %cst = arith.constant dense<0.000000e+00> : vector<16x256xf32>
    %7 = tpu.matmul %1, %6, %cst {dimension_numbers = #tpu.dot_dimension_numbers<[1], [0], [0], [1], [0, 0, 1, 1], [], []>} : vector<16x16xbf16>, vector<16x256xbf16>, vector<16x256xf32> -> vector<16x256xf32>
    %c0_3 = arith.constant 0 : index
    %c0_4 = arith.constant 0 : index
    %8 = vector.load %arg3[%c0_3, %c0_4] : memref<1x256xf32, #tpu.memory_space<vmem>>, vector<1x256xf32>
    %9 = vector.broadcast %8 : vector<1x256xf32> to vector<16x256xf32>
    %10 = arith.addf %7, %9 : vector<16x256xf32>
    %11 = vector.extract_strided_slice %10 {offsets = [0, 0], sizes = [16, 128], strides = [1, 1]} : vector<16x256xf32> to vector<16x128xf32>
    %cst_5 = arith.constant 0.000000e+00 : f32
    %12 = vector.broadcast %cst_5 : f32 to vector<16x128xf32>
    %13 = arith.maximumf %11, %12 : vector<16x128xf32>
    %14 = vector.extract_strided_slice %10 {offsets = [0, 128], sizes = [16, 128], strides = [1, 1]} : vector<16x256xf32> to vector<16x128xf32>
    %15 = arith.truncf %13 : vector<16x128xf32> to vector<16x128xbf16>
    %c0_6 = arith.constant 0 : index
    %c0_7 = arith.constant 0 : index
    %16 = vector.load %arg4[%c0_6, %c0_7] : memref<128x128xbf16, #tpu.memory_space<vmem>>, vector<128x128xbf16>
    %cst_8 = arith.constant dense<0.000000e+00> : vector<16x128xf32>
    %17 = tpu.matmul %15, %16, %cst_8 {dimension_numbers = #tpu.dot_dimension_numbers<[1], [0], [0], [1], [0, 0, 1, 1], [], []>} : vector<16x128xbf16>, vector<128x128xbf16>, vector<16x128xf32> -> vector<16x128xf32>
    %c0_9 = arith.constant 0 : index
    %c0_10 = arith.constant 0 : index
    %18 = vector.load %arg5[%c0_9, %c0_10] : memref<1x128xf32, #tpu.memory_space<vmem>>, vector<1x128xf32>
    %19 = vector.broadcast %18 : vector<1x128xf32> to vector<16x128xf32>
    %20 = arith.addf %17, %19 : vector<16x128xf32>
    %c0_11 = arith.constant 0 : index
    %c0_12 = arith.constant 0 : index
    %21 = vector.load %arg6[%c0_11, %c0_12] : memref<16x16xbf16, #tpu.memory_space<vmem>>, vector<16x16xbf16>
    %c0_13 = arith.constant 0 : index
    %c0_14 = arith.constant 0 : index
    %22 = vector.load %arg7[%c0_13, %c0_14] : memref<16x2xbf16, #tpu.memory_space<vmem>>, vector<16x2xbf16>
    %23 = vector.extract_strided_slice %2 {offsets = [0, 0], sizes = [16, 16], strides = [1, 1]} : vector<16x32xbf16> to vector<16x16xbf16>
    %cst_15 = arith.constant dense<0.000000e+00> : vector<16x16xf32>
    %24 = tpu.matmul %23, %21, %cst_15 {dimension_numbers = #tpu.dot_dimension_numbers<[1], [0], [0], [1], [0, 0, 1, 1], [], []>} : vector<16x16xbf16>, vector<16x16xbf16>, vector<16x16xf32> -> vector<16x16xf32>
    %25 = math.tanh %24 : vector<16x16xf32>
    %26 = arith.truncf %25 : vector<16x16xf32> to vector<16x16xbf16>
    %cst_16 = arith.constant dense<0.000000e+00> : vector<16x2xf32>
    %27 = tpu.matmul %26, %22, %cst_16 {dimension_numbers = #tpu.dot_dimension_numbers<[1], [0], [0], [1], [0, 0, 1, 1], [], []>} : vector<16x16xbf16>, vector<16x2xbf16>, vector<16x2xf32> -> vector<16x2xf32>
    %28 = arith.mulf %27, %5 : vector<16x2xf32>
    %cst_17 = arith.constant dense<0.000000e+00> : vector<16xf32>
    %29 = vector.multi_reduction <add>, %28, %cst_17 [1] : vector<16x2xf32> to vector<16xf32>
    %30 = vector.shape_cast %29 : vector<16xf32> to vector<16x1xf32>
    %31 = vector.extract_strided_slice %2 {offsets = [0, 16], sizes = [16, 16], strides = [1, 1]} : vector<16x32xbf16> to vector<16x16xbf16>
    %cst_18 = arith.constant dense<0.000000e+00> : vector<16x16xf32>
    %32 = tpu.matmul %31, %21, %cst_18 {dimension_numbers = #tpu.dot_dimension_numbers<[1], [0], [0], [1], [0, 0, 1, 1], [], []>} : vector<16x16xbf16>, vector<16x16xbf16>, vector<16x16xf32> -> vector<16x16xf32>
    %33 = math.tanh %32 : vector<16x16xf32>
    %34 = arith.truncf %33 : vector<16x16xf32> to vector<16x16xbf16>
    %cst_19 = arith.constant dense<0.000000e+00> : vector<16x2xf32>
    %35 = tpu.matmul %34, %22, %cst_19 {dimension_numbers = #tpu.dot_dimension_numbers<[1], [0], [0], [1], [0, 0, 1, 1], [], []>} : vector<16x16xbf16>, vector<16x2xbf16>, vector<16x2xf32> -> vector<16x2xf32>
    %36 = arith.mulf %35, %5 : vector<16x2xf32>
    %cst_20 = arith.constant dense<0.000000e+00> : vector<16xf32>
    %37 = vector.multi_reduction <add>, %36, %cst_20 [1] : vector<16x2xf32> to vector<16xf32>
    %38 = vector.shape_cast %37 : vector<16xf32> to vector<16x1xf32>
    %39 = arith.maximumf %30, %38 : vector<16x1xf32>
    %40 = arith.subf %30, %39 : vector<16x1xf32>
    %41 = math.exp %40 : vector<16x1xf32>
    %42 = arith.subf %38, %39 : vector<16x1xf32>
    %43 = math.exp %42 : vector<16x1xf32>
    %44 = arith.addf %41, %43 : vector<16x1xf32>
    %45 = tpu.reciprocal %44 {approx = true} : vector<16x1xf32> -> vector<16x1xf32>
    %46 = arith.mulf %41, %45 : vector<16x1xf32>
    %47 = vector.extract_strided_slice %3 {offsets = [0, 0], sizes = [16, 16], strides = [1, 1]} : vector<16x32xf32> to vector<16x16xf32>
    %48 = vector.broadcast %46 : vector<16x1xf32> to vector<16x16xf32>
    %49 = arith.mulf %48, %47 : vector<16x16xf32>
    %50 = arith.mulf %43, %45 : vector<16x1xf32>
    %51 = vector.extract_strided_slice %3 {offsets = [0, 16], sizes = [16, 16], strides = [1, 1]} : vector<16x32xf32> to vector<16x16xf32>
    %52 = vector.broadcast %50 : vector<16x1xf32> to vector<16x16xf32>
    %53 = arith.mulf %52, %51 : vector<16x16xf32>
    %54 = arith.addf %49, %53 : vector<16x16xf32>
    %55 = vector.extract_strided_slice %5 {offsets = [0, 0], sizes = [16, 1], strides = [1, 1]} : vector<16x2xf32> to vector<16x1xf32>
    %56 = vector.broadcast %55 : vector<16x1xf32> to vector<16x16xf32>
    %57 = arith.mulf %56, %54 : vector<16x16xf32>
    %58 = vector.extract_strided_slice %5 {offsets = [0, 1], sizes = [16, 1], strides = [1, 1]} : vector<16x2xf32> to vector<16x1xf32>
    %59 = vector.broadcast %58 : vector<16x1xf32> to vector<16x16xf32>
    %60 = arith.mulf %59, %54 : vector<16x16xf32>
    %61 = tpu.concatenate %57, %60 in 1 : vector<16x16xf32>, vector<16x16xf32> -> vector<16x32xf32>
    %62 = arith.truncf %61 : vector<16x32xf32> to vector<16x32xbf16>
    %c0_21 = arith.constant 0 : index
    %c0_22 = arith.constant 0 : index
    %63 = vector.load %arg8[%c0_21, %c0_22] : memref<32x128xbf16, #tpu.memory_space<vmem>>, vector<32x128xbf16>
    %cst_23 = arith.constant dense<0.000000e+00> : vector<16x128xf32>
    %64 = tpu.matmul %62, %63, %cst_23 {dimension_numbers = #tpu.dot_dimension_numbers<[1], [0], [0], [1], [0, 0, 1, 1], [], []>} : vector<16x32xbf16>, vector<32x128xbf16>, vector<16x128xf32> -> vector<16x128xf32>
    %65 = arith.addf %20, %64 : vector<16x128xf32>
    %66 = arith.addf %65, %14 : vector<16x128xf32>
    %67 = arith.mulf %66, %66 : vector<16x128xf32>
    %cst_24 = arith.constant dense<0.000000e+00> : vector<16xf32>
    %68 = vector.multi_reduction <add>, %67, %cst_24 [1] : vector<16x128xf32> to vector<16xf32>
    %69 = vector.shape_cast %68 : vector<16xf32> to vector<16x1xf32>
    %cst_25 = arith.constant 1.000000e-24 : f32
    %70 = vector.broadcast %cst_25 : f32 to vector<16x1xf32>
    %71 = arith.maximumf %69, %70 : vector<16x1xf32>
    %72 = math.rsqrt %71 : vector<16x1xf32>
    %73 = vector.broadcast %72 : vector<16x1xf32> to vector<16x128xf32>
    %74 = arith.mulf %66, %73 : vector<16x128xf32>
    %75 = arith.truncf %74 : vector<16x128xf32> to vector<16x128xbf16>
    %c0_26 = arith.constant 0 : index
    %c0_27 = arith.constant 0 : index
    %76 = vector.load %arg9[%c0_26, %c0_27] : memref<16x128xbf16, #tpu.memory_space<vmem>>, vector<16x128xbf16>
    tpu.vector_store %arg9[%c0_26, %c0_27], %75 {strides = array<i32>} : memref<16x128xbf16, #tpu.memory_space<vmem>>, vector<16x128xbf16>,
    return
  }
  func.func @transform_0(%arg0: i32) -> (i32, i32) {
    %c0_i32 = arith.constant 0 : i32
    %c0_i32_0 = arith.constant 0 : i32
    return %arg0, %c0_i32 : i32, i32
  }
  func.func @transform_1(%arg0: i32) -> (i32, i32) {
    %c0_i32 = arith.constant 0 : i32
    %c0_i32_0 = arith.constant 0 : i32
    %c0_i32_1 = arith.constant 0 : i32
    return %c0_i32, %c0_i32_0 : i32, i32
  }
  func.func @transform_2(%arg0: i32) -> (i32, i32) {
    %c0_i32 = arith.constant 0 : i32
    %c0_i32_0 = arith.constant 0 : i32
    %c0_i32_1 = arith.constant 0 : i32
    return %c0_i32, %c0_i32_0 : i32, i32
  }
  func.func @transform_3(%arg0: i32) -> (i32, i32) {
    %c0_i32 = arith.constant 0 : i32
    %c0_i32_0 = arith.constant 0 : i32
    %c0_i32_1 = arith.constant 0 : i32
    return %c0_i32, %c0_i32_0 : i32, i32
  }
  func.func @transform_4(%arg0: i32) -> (i32, i32) {
    %c0_i32 = arith.constant 0 : i32
    %c0_i32_0 = arith.constant 0 : i32
    %c0_i32_1 = arith.constant 0 : i32
    return %c0_i32, %c0_i32_0 : i32, i32
  }
  func.func @transform_5(%arg0: i32) -> (i32, i32) {
    %c0_i32 = arith.constant 0 : i32
    %c0_i32_0 = arith.constant 0 : i32
    %c0_i32_1 = arith.constant 0 : i32
    return %c0_i32, %c0_i32_0 : i32, i32
  }
  func.func @transform_6(%arg0: i32) -> (i32, i32) {
    %c0_i32 = arith.constant 0 : i32
    %c0_i32_0 = arith.constant 0 : i32
    %c0_i32_1 = arith.constant 0 : i32
    return %c0_i32, %c0_i32_0 : i32, i32
  }
  func.func @transform_7(%arg0: i32) -> (i32, i32) {
    %c0_i32 = arith.constant 0 : i32
    %c0_i32_0 = arith.constant 0 : i32
    %c0_i32_1 = arith.constant 0 : i32
    return %c0_i32, %c0_i32_0 : i32, i32
  }
  func.func @transform_8(%arg0: i32) -> (i32, i32) {
    %c0_i32 = arith.constant 0 : i32
    %c0_i32_0 = arith.constant 0 : i32
    return %arg0, %c0_i32 : i32, i32
  }
}

</mosaic_0001>

<llo_original>
// kernel: course_forward_pallas.1
$region0: #{course_forward_pallas.1}
  #allocation0 [shape = 'u32[]', space=smem, size = 0x4, offset = 0x4, fixed_abs, tag = 'smem constant byte address 0x4 - core index']
  #allocation1 [shape = 'u32[144,128]{1,0:T(1,128)}', space=vmem, size = 0x12000, scoped, tag = 'internal scratch']
  %s0 = inlined_call_operand.vmem [shape: bf16[16,50], index: 0, kind: input, shape index: {}]
  %s1 = inlined_call_operand.vmem [shape: bf16[16,256], index: 1, kind: input, shape index: {}]
  %s2 = inlined_call_operand.vmem [shape: f32[1,256], index: 2, kind: input, shape index: {}]
  %s3 = inlined_call_operand.vmem [shape: bf16[128,128], index: 3, kind: input, shape index: {}]
  %s4 = inlined_call_operand.vmem [shape: f32[1,128], index: 4, kind: input, shape index: {}]
  %s5 = inlined_call_operand.vmem [shape: bf16[16,16], index: 5, kind: input, shape index: {}]
  %s6 = inlined_call_operand.vmem [shape: bf16[16,2], index: 6, kind: input, shape index: {}]
  %s7 = inlined_call_operand.vmem [shape: bf16[32,128], index: 7, kind: input, shape index: {}]
  %s8 = inlined_call_operand.vmem [shape: bf16[16,128], index: 8, kind: output, shape index: {}]
  %s9 = sld [smem:[#allocation0]]
  $region42: #{course_forward_pallas.1} parent=0
    _
  %s11 = ssub.s32 1, %s9
  %s12 = scalar_select 0, %s11, %s9
  // Predicated region
  $region2: #{course_forward_pallas.1} parent=0 // pred_check
    _
  $region3: #{course_forward_pallas.1} parent=0 // pred_check_branch
    %14 = sbr.rel (0) target = $region5
  $region4: #{course_forward_pallas.1} parent=0 // pred_region
    _
  $region5: #{course_forward_pallas.1} parent=0 // pred_fallthru
    _
  // Predicated region
  $region6: #{course_forward_pallas.1} parent=0 // pred_check
    _
  $region7: #{course_forward_pallas.1} parent=0 // pred_check_branch
    %16 = sbr.rel (0) target = $region9
  $region8: #{course_forward_pallas.1} parent=0 // pred_region
    _
  $region9: #{course_forward_pallas.1} parent=0 // pred_fallthru
    _
  // Predicated region
  $region10: #{course_forward_pallas.1} parent=0 // pred_check
    _
  $region11: #{course_forward_pallas.1} parent=0 // pred_check_branch
    %18 = sbr.rel (0) target = $region13
  $region12: #{course_forward_pallas.1} parent=0 // pred_region
    _
  $region13: #{course_forward_pallas.1} parent=0 // pred_fallthru
    _
  // Predicated region
  $region14: #{course_forward_pallas.1} parent=0 // pred_check
    _
  $region15: #{course_forward_pallas.1} parent=0 // pred_check_branch
    %20 = sbr.rel (0) target = $region17
  $region16: #{course_forward_pallas.1} parent=0 // pred_region
    _
  $region17: #{course_forward_pallas.1} parent=0 // pred_fallthru
    _
  // Predicated region
  $region18: #{course_forward_pallas.1} parent=0 // pred_check
    _
  $region19: #{course_forward_pallas.1} parent=0 // pred_check_branch
    %22 = sbr.rel (0) target = $region21
  $region20: #{course_forward_pallas.1} parent=0 // pred_region
    _
  $region21: #{course_forward_pallas.1} parent=0 // pred_fallthru
    _
  // Predicated region
  $region22: #{course_forward_pallas.1} parent=0 // pred_check
    _
  $region23: #{course_forward_pallas.1} parent=0 // pred_check_branch
    %24 = sbr.rel (0) target = $region25
  $region24: #{course_forward_pallas.1} parent=0 // pred_region
    _
  $region25: #{course_forward_pallas.1} parent=0 // pred_fallthru
    _
  // Predicated region
  $region26: #{course_forward_pallas.1} parent=0 // pred_check
    _
  $region27: #{course_forward_pallas.1} parent=0 // pred_check_branch
    %26 = sbr.rel (0) target = $region29
  $region28: #{course_forward_pallas.1} parent=0 // pred_region
    _
  $region29: #{course_forward_pallas.1} parent=0 // pred_fallthru
    _
  // Predicated region
  $region30: #{course_forward_pallas.1} parent=0 // pred_check
    _
  $region31: #{course_forward_pallas.1} parent=0 // pred_check_branch
    %28 = sbr.rel (0) target = $region33
  $region32: #{course_forward_pallas.1} parent=0 // pred_region
    _
  $region33: #{course_forward_pallas.1} parent=0 // pred_fallthru
    _
  %v30 = vld [vmem:[%s0] sm:$0xf]
  %v31 = vld [vmem:[%s0 + $0x4] sm:$0xf]
  %v32 = vunpack.c.l.bf16 %v30
  %v33 = vunpack.c.l.bf16 %v31
  %v34 = vld [vmem:[%s1] sm:$0xff]
  %v35 = vld [vmem:[%s1 + $0x8] sm:$0xff]
  %v36 = vld [vmem:[%s2] sm:$0x3]
  %v38 = vlaneseq
  %v39 = vshrl.u32 %v38, 7
  %v40 = vsub.s32 0, %v39
  %v41 = vrot.slane %v36, %v40
  %v42 = vlaneseq
  %v43 = vshrl.u32 %v42, 7
  %v44 = vsub.s32 1, %v43
  %v45 = vrot.slane %v36, %v44
  %v50 = vunpack.c.l.b16 %v30
  %v51 = vunpack.c.l.b16 %v31
  %v52 = vpack.c.b16 %v51, %v50
  %v55 = vunpack.c.l.b16 %v34
  %v56 = vunpack.c.h.b16 %v34
  %v57 = vunpack.c.l.b16 %v35
  %v58 = vunpack.c.h.b16 %v35
  %v59 = vpack.c.b16 %v57, %v55
  %v60 = vpack.c.b16 %v58, %v56
  %vm63 = vcmask 130048
  %v65 = vsel %vm63, %v52, 0
  %67 = vmatprep.subr.bf16.mxu0 0
  %68 = vmatpush1.bf16.msra.mxu0 0
  %69 = vmatprep.subr.bf16.mxu0 0
  %70 = vmatpush1.bf16.msra.mxu0 0
  %71 = vmatprep.subr.bf16.mxu0 0
  %72 = vmatpush1.bf16.msra.mxu0 0
  %73 = vmatprep.subr.bf16.mxu0 0
  %74 = vmatpush1.bf16.msra.mxu0 0
  %75 = vmatprep.subr.bf16.mxu0 0
  %76 = vmatpush1.bf16.msra.mxu0 0
  %77 = vmatprep.subr.bf16.mxu0 0
  %78 = vmatpush1.bf16.msra.mxu0 0
  %79 = vmatprep.subr.bf16.mxu0 0
  %80 = vmatpush1.bf16.msra.mxu0 0
  %81 = vmatprep.subr.bf16.mxu0 %v60
  %82 = vmatpush1.bf16.msra.mxu0 %v59
  %83 = vmatprep.subr.bf16.mxu0 0
  %84 = vmatpush2.bf16.msra.mxu0 0
  %85 = vmatprep.subr.bf16.mxu0 0
  %86 = vmatpush2.bf16.msra.mxu0 0
  %87 = vmatprep.subr.bf16.mxu0 0
  %88 = vmatpush2.bf16.msra.mxu0 0
  %89 = vmatprep.subr.bf16.mxu0 0
  %90 = vmatpush2.bf16.msra.mxu0 0
  %91 = vmatprep.subr.bf16.mxu0 0
  %92 = vmatpush2.bf16.msra.mxu0 0
  %93 = vmatprep.subr.bf16.mxu0 0
  %94 = vmatpush2.bf16.msra.mxu0 0
  %95 = vmatprep.subr.bf16.mxu0 0
  %96 = vmatpush2.bf16.msra.mxu0 0
  %97 = vmatprep.subr.bf16.mxu0 0
  %98 = vmatpush2.bf16.msra.mxu0 0
  %99 = vmatprep.mubr.bf16.mxu0 0
  %100 = vmatmul.mubr.bf16.gmra.mxu0 %v65
  %v101 = vpop.f32.mrf.mxu0
  %v102 = vadd.f32 %v41, %v101
  %v103 = vpop.f32.mrf.mxu0
  %v104 = vadd.f32 %v45, %v103
  %v105 = vpop.f32.mrf.mxu0
  %v106 = vadd.f32 %v41, %v105
  %v107 = vpop.f32.mrf.mxu0
  %v108 = vadd.f32 %v45, %v107
  %109 = vdwg.mxu0
  %v110 = vmax.f32 %v102, 0.0
  %v111 = vmax.f32 %v106, 0.0
  %v112 = vpack.c.bf16 %v111, %v110
  %v113 = vld [vmem:[%s3] sm:$0xf]
  %v114 = vld [vmem:[%s3 + $0x4] sm:$0xf]
  %v115 = vld [vmem:[%s3 + $0x8] sm:$0xf]
  %v116 = vld [vmem:[%s3 + $0xc] sm:$0xf]
  %v117 = vld [vmem:[%s3 + $0x10] sm:$0xf]
  %v118 = vld [vmem:[%s3 + $0x14] sm:$0xf]
  %v119 = vld [vmem:[%s3 + $0x18] sm:$0xf]
  %v120 = vld [vmem:[%s3 + $0x1c] sm:$0xf]
  %v121 = vld [vmem:[%s3 + $0x20] sm:$0xf]
  %v122 = vld [vmem:[%s3 + $0x24] sm:$0xf]
  %v123 = vld [vmem:[%s3 + $0x28] sm:$0xf]
  %v124 = vld [vmem:[%s3 + $0x2c] sm:$0xf]
  %v125 = vld [vmem:[%s3 + $0x30] sm:$0xf]
  %v126 = vld [vmem:[%s3 + $0x34] sm:$0xf]
  %v127 = vld [vmem:[%s3 + $0x38] sm:$0xf]
  %v128 = vld [vmem:[%s3 + $0x3c] sm:$0xf]
  %v129 = vld [vmem:[%s4] sm:$0x1]
  %v131 = vlaneseq
  %v132 = vshrl.u32 %v131, 7
  %v133 = vsub.s32 0, %v132
  %v134 = vrot.slane %v129, %v133
  %v152 = vunpack.c.l.b16 %v113
  %v153 = vunpack.c.l.b16 %v114
  %v154 = vunpack.c.l.b16 %v115
  %v155 = vunpack.c.l.b16 %v116
  %v156 = vunpack.c.l.b16 %v117
  %v157 = vunpack.c.l.b16 %v118
  %v158 = vunpack.c.l.b16 %v119
  %v159 = vunpack.c.l.b16 %v120
  %v160 = vunpack.c.l.b16 %v121
  %v161 = vunpack.c.l.b16 %v122
  %v162 = vunpack.c.l.b16 %v123
  %v163 = vunpack.c.l.b16 %v124
  %v164 = vunpack.c.l.b16 %v125
  %v165 = vunpack.c.l.b16 %v126
  %v166 = vunpack.c.l.b16 %v127
  %v167 = vunpack.c.l.b16 %v128
  %v168 = vpack.c.b16 %v153, %v152
  %v169 = vpack.c.b16 %v155, %v154
  %v170 = vpack.c.b16 %v157, %v156
  %v171 = vpack.c.b16 %v159, %v158
  %v172 = vpack.c.b16 %v161, %v160
  %v173 = vpack.c.b16 %v163, %v162
  %v174 = vpack.c.b16 %v165, %v164
  %v175 = vpack.c.b16 %v167, %v166
  %184 = vmatprep.subr.bf16.mxu0 0
  %185 = vmatpush1.bf16.msra.mxu0 %v175
  %186 = vmatprep.subr.bf16.mxu0 0
  %187 = vmatpush1.bf16.msra.mxu0 %v174
  %188 = vmatprep.subr.bf16.mxu0 0
  %189 = vmatpush1.bf16.msra.mxu0 %v173
  %190 = vmatprep.subr.bf16.mxu0 0
  %191 = vmatpush1.bf16.msra.mxu0 %v172
  %192 = vmatprep.subr.bf16.mxu0 0
  %193 = vmatpush1.bf16.msra.mxu0 %v171
  %194 = vmatprep.subr.bf16.mxu0 0
  %195 = vmatpush1.bf16.msra.mxu0 %v170
  %196 = vmatprep.subr.bf16.mxu0 0
  %197 = vmatpush1.bf16.msra.mxu0 %v169
  %198 = vmatprep.subr.bf16.mxu0 0
  %199 = vmatpush1.bf16.msra.mxu0 %v168
  %200 = vmatprep.subr.bf16.mxu0 0
  %201 = vmatpush2.bf16.msra.mxu0 0
  %202 = vmatprep.subr.bf16.mxu0 0
  %203 = vmatpush2.bf16.msra.mxu0 0
  %204 = vmatprep.subr.bf16.mxu0 0
  %205 = vmatpush2.bf16.msra.mxu0 0
  %206 = vmatprep.subr.bf16.mxu0 0
  %207 = vmatpush2.bf16.msra.mxu0 0
  %208 = vmatprep.subr.bf16.mxu0 0
  %209 = vmatpush2.bf16.msra.mxu0 0
  %210 = vmatprep.subr.bf16.mxu0 0
  %211 = vmatpush2.bf16.msra.mxu0 0
  %212 = vmatprep.subr.bf16.mxu0 0
  %213 = vmatpush2.bf16.msra.mxu0 0
  %214 = vmatprep.subr.bf16.mxu0 0
  %215 = vmatpush2.bf16.msra.mxu0 0
  %216 = vmatprep.mubr.bf16.mxu0 0
  %217 = vmatmul.mubr.bf16.gmra.mxu0 %v112
  %v218 = vpop.f32.mrf.mxu0
  %v219 = vadd.f32 %v134, %v218
  %v220 = vpop.f32.mrf.mxu0
  %v221 = vpop.f32.mrf.mxu0
  %v222 = vadd.f32 %v134, %v221
  %v223 = vpop.f32.mrf.mxu0
  %224 = vdwg.mxu0
  %v225 = vld [vmem:[%s5] sm:$0xf]
  %v226 = vld [vmem:[%s5 + $0x4] sm:$0xf]
  %v227 = vld [vmem:[%s6] sm:$0xf]
  %v228 = vld [vmem:[%s6 + $0x4] sm:$0xf]
  %229 = vrot.lane.b32.xlu0 %v52, 112
  %v230 = vpop.permute.xlu0 %229
  %v233 = vunpack.c.l.b16 %v225
  %v234 = vunpack.c.l.b16 %v226
  %v235 = vpack.c.b16 %v234, %v233
  %v238 = vsel %vm63, %v230, 0
  %240 = vmatprep.subr.bf16.mxu0 0
  %241 = vmatpush1.bf16.msra.mxu0 0
  %242 = vmatprep.subr.bf16.mxu0 0
  %243 = vmatpush1.bf16.msra.mxu0 0
  %244 = vmatprep.subr.bf16.mxu0 0
  %245 = vmatpush1.bf16.msra.mxu0 0
  %246 = vmatprep.subr.bf16.mxu0 0
  %247 = vmatpush1.bf16.msra.mxu0 0
  %248 = vmatprep.subr.bf16.mxu0 0
  %249 = vmatpush1.bf16.msra.mxu0 0
  %250 = vmatprep.subr.bf16.mxu0 0
  %251 = vmatpush1.bf16.msra.mxu0 0
  %252 = vmatprep.subr.bf16.mxu0 0
  %253 = vmatpush1.bf16.msra.mxu0 0
  %254 = vmatprep.subr.bf16.mxu0 0
  %255 = vmatpush1.bf16.msra.mxu0 %v235
  %256 = vmatprep.subr.bf16.mxu0 0
  %257 = vmatpush2.bf16.msra.mxu0 0
  %258 = vmatprep.subr.bf16.mxu0 0
  %259 = vmatpush2.bf16.msra.mxu0 0
  %260 = vmatprep.subr.bf16.mxu0 0
  %261 = vmatpush2.bf16.msra.mxu0 0
  %262 = vmatprep.subr.bf16.mxu0 0
  %263 = vmatpush2.bf16.msra.mxu0 0
  %264 = vmatprep.subr.bf16.mxu0 0
  %265 = vmatpush2.bf16.msra.mxu0 0
  %266 = vmatprep.subr.bf16.mxu0 0
  %267 = vmatpush2.bf16.msra.mxu0 0
  %268 = vmatprep.subr.bf16.mxu0 0
  %269 = vmatpush2.bf16.msra.mxu0 0
  %270 = vmatprep.subr.bf16.mxu0 0
  %271 = vmatpush2.bf16.msra.mxu0 0
  %272 = vmatprep.mubr.bf16.mxu0 0
  %273 = vmatmul.mubr.bf16.gmra.mxu0 %v238
  %v274 = vpop.f32.mrf.mxu0
  %v275 = vadd.f32 0.0, %v274
  %v276 = vpop.f32.mrf.mxu0
  %v277 = vpop.f32.mrf.mxu0
  %v278 = vadd.f32 0.0, %v277
  %v279 = vpop.f32.mrf.mxu0
  %280 = vdwg.mxu0
  %v281 = vtanh.pop %v275
  %v282 = vtanh.pop %v278
  %v283 = vpack.c.bf16 %v282, %v281
  %v286 = vunpack.c.l.b16 %v227
  %v287 = vunpack.c.l.b16 %v228
  %v288 = vpack.c.b16 %v287, %v286
  %v291 = vsel %vm63, %v283, 0
  %293 = vmatprep.subr.bf16.mxu0 0
  %294 = vmatpush1.bf16.msra.mxu0 0
  %295 = vmatprep.subr.bf16.mxu0 0
  %296 = vmatpush1.bf16.msra.mxu0 0
  %297 = vmatprep.subr.bf16.mxu0 0
  %298 = vmatpush1.bf16.msra.mxu0 0
  %299 = vmatprep.subr.bf16.mxu0 0
  %300 = vmatpush1.bf16.msra.mxu0 0
  %301 = vmatprep.subr.bf16.mxu0 0
  %302 = vmatpush1.bf16.msra.mxu0 0
  %303 = vmatprep.subr.bf16.mxu0 0
  %304 = vmatpush1.bf16.msra.mxu0 0
  %305 = vmatprep.subr.bf16.mxu0 0
  %306 = vmatpush1.bf16.msra.mxu0 0
  %307 = vmatprep.subr.bf16.mxu0 0
  %308 = vmatpush1.bf16.msra.mxu0 %v288
  %309 = vmatprep.subr.bf16.mxu0 0
  %310 = vmatpush2.bf16.msra.mxu0 0
  %311 = vmatprep.subr.bf16.mxu0 0
  %312 = vmatpush2.bf16.msra.mxu0 0
  %313 = vmatprep.subr.bf16.mxu0 0
  %314 = vmatpush2.bf16.msra.mxu0 0
  %315 = vmatprep.subr.bf16.mxu0 0
  %316 = vmatpush2.bf16.msra.mxu0 0
  %317 = vmatprep.subr.bf16.mxu0 0
  %318 = vmatpush2.bf16.msra.mxu0 0
  %319 = vmatprep.subr.bf16.mxu0 0
  %320 = vmatpush2.bf16.msra.mxu0 0
  %321 = vmatprep.subr.bf16.mxu0 0
  %322 = vmatpush2.bf16.msra.mxu0 0
  %323 = vmatprep.subr.bf16.mxu0 0
  %324 = vmatpush2.bf16.msra.mxu0 0
  %325 = vmatprep.mubr.bf16.mxu0 0
  %326 = vmatmul.mubr.bf16.gmra.mxu0 %v291
  %v327 = vpop.f32.mrf.mxu0
  %v328 = vadd.f32 0.0, %v327
  %v329 = vpop.f32.mrf.mxu0
  %v330 = vpop.f32.mrf.mxu0
  %v331 = vadd.f32 0.0, %v330
  %v332 = vpop.f32.mrf.mxu0
  %333 = vdwg.mxu0
  %336 = vrot.lane.b32.xlu0 %v32, 80
  %v337 = vpop.permute.xlu0 %336
  %338 = vrot.lane.b32.xlu0 %v33, 80
  %v339 = vpop.permute.xlu0 %338
  %v342 = vmul.f32 %v328, %v337
  %v343 = vmul.f32 %v331, %v339
  %vm344 = vcmask 15360
  %v345 = vsel %vm344, %v342, 0.0
  %346 = vadd.xlane.f32.xlu0 %v345
  %v347 = vpop.xlane.xlu0 %346
  %v348 = vsel %vm344, %v343, 0.0
  %349 = vadd.xlane.f32.xlu0 %v348
  %v350 = vpop.xlane.xlu0 %349
  %351 = vrot.lane.b32.xlu0 %v52, 96
  %v352 = vpop.permute.xlu0 %351
  %v354 = vsel %vm63, %v352, 0
  %356 = vmatprep.subr.bf16.mxu0 0
  %357 = vmatpush1.bf16.msra.mxu0 0
  %358 = vmatprep.subr.bf16.mxu0 0
  %359 = vmatpush1.bf16.msra.mxu0 0
  %360 = vmatprep.subr.bf16.mxu0 0
  %361 = vmatpush1.bf16.msra.mxu0 0
  %362 = vmatprep.subr.bf16.mxu0 0
  %363 = vmatpush1.bf16.msra.mxu0 0
  %364 = vmatprep.subr.bf16.mxu0 0
  %365 = vmatpush1.bf16.msra.mxu0 0
  %366 = vmatprep.subr.bf16.mxu0 0
  %367 = vmatpush1.bf16.msra.mxu0 0
  %368 = vmatprep.subr.bf16.mxu0 0
  %369 = vmatpush1.bf16.msra.mxu0 0
  %370 = vmatprep.subr.bf16.mxu0 0
  %371 = vmatpush1.bf16.msra.mxu0 %v235
  %372 = vmatprep.subr.bf16.mxu0 0
  %373 = vmatpush2.bf16.msra.mxu0 0
  %374 = vmatprep.subr.bf16.mxu0 0
  %375 = vmatpush2.bf16.msra.mxu0 0
  %376 = vmatprep.subr.bf16.mxu0 0
  %377 = vmatpush2.bf16.msra.mxu0 0
  %378 = vmatprep.subr.bf16.mxu0 0
  %379 = vmatpush2.bf16.msra.mxu0 0
  %380 = vmatprep.subr.bf16.mxu0 0
  %381 = vmatpush2.bf16.msra.mxu0 0
  %382 = vmatprep.subr.bf16.mxu0 0
  %383 = vmatpush2.bf16.msra.mxu0 0
  %384 = vmatprep.subr.bf16.mxu0 0
  %385 = vmatpush2.bf16.msra.mxu0 0
  %386 = vmatprep.subr.bf16.mxu0 0
  %387 = vmatpush2.bf16.msra.mxu0 0
  %388 = vmatprep.mubr.bf16.mxu0 0
  %389 = vmatmul.mubr.bf16.gmra.mxu0 %v354
  %v390 = vpop.f32.mrf.mxu0
  %v391 = vadd.f32 0.0, %v390
  %v392 = vpop.f32.mrf.mxu0
  %v393 = vpop.f32.mrf.mxu0
  %v394 = vadd.f32 0.0, %v393
  %v395 = vpop.f32.mrf.mxu0
  %396 = vdwg.mxu0
  %v397 = vtanh.pop %v391
  %v398 = vtanh.pop %v394
  %v399 = vpack.c.bf16 %v398, %v397
  %v401 = vsel %vm63, %v399, 0
  %403 = vmatprep.subr.bf16.mxu0 0
  %404 = vmatpush1.bf16.msra.mxu0 0
  %405 = vmatprep.subr.bf16.mxu0 0
  %406 = vmatpush1.bf16.msra.mxu0 0
  %407 = vmatprep.subr.bf16.mxu0 0
  %408 = vmatpush1.bf16.msra.mxu0 0
  %409 = vmatprep.subr.bf16.mxu0 0
  %410 = vmatpush1.bf16.msra.mxu0 0
  %411 = vmatprep.subr.bf16.mxu0 0
  %412 = vmatpush1.bf16.msra.mxu0 0
  %413 = vmatprep.subr.bf16.mxu0 0
  %414 = vmatpush1.bf16.msra.mxu0 0
  %415 = vmatprep.subr.bf16.mxu0 0
  %416 = vmatpush1.bf16.msra.mxu0 0
  %417 = vmatprep.subr.bf16.mxu0 0
  %418 = vmatpush1.bf16.msra.mxu0 %v288
  %419 = vmatprep.subr.bf16.mxu0 0
  %420 = vmatpush2.bf16.msra.mxu0 0
  %421 = vmatprep.subr.bf16.mxu0 0
  %422 = vmatpush2.bf16.msra.mxu0 0
  %423 = vmatprep.subr.bf16.mxu0 0
  %424 = vmatpush2.bf16.msra.mxu0 0
  %425 = vmatprep.subr.bf16.mxu0 0
  %426 = vmatpush2.bf16.msra.mxu0 0
  %427 = vmatprep.subr.bf16.mxu0 0
  %428 = vmatpush2.bf16.msra.mxu0 0
  %429 = vmatprep.subr.bf16.mxu0 0
  %430 = vmatpush2.bf16.msra.mxu0 0
  %431 = vmatprep.subr.bf16.mxu0 0
  %432 = vmatpush2.bf16.msra.mxu0 0
  %433 = vmatprep.subr.bf16.mxu0 0
  %434 = vmatpush2.bf16.msra.mxu0 0
  %435 = vmatprep.mubr.bf16.mxu0 0
  %436 = vmatmul.mubr.bf16.gmra.mxu0 %v401
  %v437 = vpop.f32.mrf.mxu0
  %v438 = vadd.f32 0.0, %v437
  %v439 = vpop.f32.mrf.mxu0
  %v440 = vpop.f32.mrf.mxu0
  %v441 = vadd.f32 0.0, %v440
  %v442 = vpop.f32.mrf.mxu0
  %443 = vdwg.mxu0
  %v444 = vmul.f32 %v438, %v337
  %v445 = vmul.f32 %v441, %v339
  %v446 = vsel %vm344, %v444, 0.0
  %447 = vadd.xlane.f32.xlu0 %v446
  %v448 = vpop.xlane.xlu0 %447
  %v449 = vsel %vm344, %v445, 0.0
  %450 = vadd.xlane.f32.xlu0 %v449
  %v451 = vpop.xlane.xlu0 %450
  %v452 = vmax.f32 %v347, %v448
  %v453 = vmax.f32 %v350, %v451
  %v454 = vsub.f32 %v347, %v452
  %v455 = vsub.f32 %v350, %v453
  %v456 = vmul.f32 %v454, 1.442695
  %v457 = vpow.pop %v456
  %v458 = vmul.f32 %v455, 1.442695
  %v459 = vpow.pop %v458
  %v460 = vsub.f32 %v448, %v452
  %v461 = vsub.f32 %v451, %v453
  %v462 = vmul.f32 %v460, 1.442695
  %v463 = vpow.pop %v462
  %v464 = vmul.f32 %v461, 1.442695
  %v465 = vpow.pop %v464
  %v466 = vadd.f32 %v457, %v463
  %v467 = vadd.f32 %v459, %v465
  %v468 = vrcp.pop %v466
  %v469 = vrcp.pop %v467
  %v470 = vmul.f32 %v457, %v468
  %v471 = vmul.f32 %v459, %v469
  %v472 = vmul.f32 %v470, %v32
  %v473 = vmul.f32 %v471, %v33
  %v474 = vmul.f32 %v463, %v468
  %v475 = vmul.f32 %v465, %v469
  %v476 = vmul.f32 %v474, %v32
  %v477 = vmul.f32 %v475, %v33
  %480 = vrot.lane.b32.xlu0 %v476, 112
  %v481 = vpop.permute.xlu0 %480
  %482 = vrot.lane.b32.xlu0 %v477, 112
  %v483 = vpop.permute.xlu0 %482
  %v486 = vadd.f32 %v472, %v481
  %v487 = vadd.f32 %v473, %v483
  %488 = vset.pattern.permute.xlu0 48
  %489 = vperm.xlu0 %488, %v32
  %v490 = vpop.permute.xlu0 %489
  %492 = vset.pattern.permute.xlu0 48
  %493 = vperm.xlu0 %492, %v33
  %v494 = vpop.permute.xlu0 %493
  %v496 = vmul.f32 %v490, %v486
  %v497 = vmul.f32 %v494, %v487
  %498 = vset.pattern.permute.xlu0 49
  %499 = vperm.xlu0 %498, %v32
  %v500 = vpop.permute.xlu0 %499
  %502 = vset.pattern.permute.xlu0 49
  %503 = vperm.xlu0 %502, %v33
  %v504 = vpop.permute.xlu0 %503
  %v506 = vmul.f32 %v500, %v486
  %v507 = vmul.f32 %v504, %v487
  %510 = vrot.lane.b32.xlu0 %v496, 112
  %v511 = vpop.permute.xlu0 %510
  %512 = vrot.lane.b32.xlu0 %v497, 112
  %v513 = vpop.permute.xlu0 %512
  %v516 = vsel %vm63, %v511, %v506
  %v517 = vsel %vm63, %v513, %v507
  %v518 = vpack.c.bf16 %v517, %v516
  %v519 = vld [vmem:[%s7] sm:$0xf]
  %v520 = vld [vmem:[%s7 + $0x4] sm:$0xf]
  %v521 = vld [vmem:[%s7 + $0x8] sm:$0xf]
  %v522 = vld [vmem:[%s7 + $0xc] sm:$0xf]
  %v527 = vunpack.c.l.b16 %v519
  %v528 = vunpack.c.l.b16 %v520
  %v529 = vunpack.c.l.b16 %v521
  %v530 = vunpack.c.l.b16 %v522
  %v531 = vpack.c.b16 %v528, %v527
  %v532 = vpack.c.b16 %v530, %v529
  %vm535 = vcmask 261120
  %v537 = vsel %vm535, %v518, 0
  %539 = vmatprep.subr.bf16.mxu0 0
  %540 = vmatpush1.bf16.msra.mxu0 0
  %541 = vmatprep.subr.bf16.mxu0 0
  %542 = vmatpush1.bf16.msra.mxu0 0
  %543 = vmatprep.subr.bf16.mxu0 0
  %544 = vmatpush1.bf16.msra.mxu0 0
  %545 = vmatprep.subr.bf16.mxu0 0
  %546 = vmatpush1.bf16.msra.mxu0 0
  %547 = vmatprep.subr.bf16.mxu0 0
  %548 = vmatpush1.bf16.msra.mxu0 0
  %549 = vmatprep.subr.bf16.mxu0 0
  %550 = vmatpush1.bf16.msra.mxu0 0
  %551 = vmatprep.subr.bf16.mxu0 0
  %552 = vmatpush1.bf16.msra.mxu0 %v532
  %553 = vmatprep.subr.bf16.mxu0 0
  %554 = vmatpush1.bf16.msra.mxu0 %v531
  %555 = vmatprep.subr.bf16.mxu0 0
  %556 = vmatpush2.bf16.msra.mxu0 0
  %557 = vmatprep.subr.bf16.mxu0 0
  %558 = vmatpush2.bf16.msra.mxu0 0
  %559 = vmatprep.subr.bf16.mxu0 0
  %560 = vmatpush2.bf16.msra.mxu0 0
  %561 = vmatprep.subr.bf16.mxu0 0
  %562 = vmatpush2.bf16.msra.mxu0 0
  %563 = vmatprep.subr.bf16.mxu0 0
  %564 = vmatpush2.bf16.msra.mxu0 0
  %565 = vmatprep.subr.bf16.mxu0 0
  %566 = vmatpush2.bf16.msra.mxu0 0
  %567 = vmatprep.subr.bf16.mxu0 0
  %568 = vmatpush2.bf16.msra.mxu0 0
  %569 = vmatprep.subr.bf16.mxu0 0
  %570 = vmatpush2.bf16.msra.mxu0 0
  %571 = vmatprep.mubr.bf16.mxu0 0
  %572 = vmatmul.mubr.bf16.gmra.mxu0 %v537
  %v573 = vpop.f32.mrf.mxu0
  %v574 = vadd.f32 0.0, %v573
  %v575 = vpop.f32.mrf.mxu0
  %v576 = vpop.f32.mrf.mxu0
  %v577 = vadd.f32 0.0, %v576
  %v578 = vpop.f32.mrf.mxu0
  %579 = vdwg.mxu0
  %v580 = vadd.f32 %v219, %v574
  %v581 = vadd.f32 %v222, %v577
  %v582 = vadd.f32 %v580, %v104
  %v583 = vadd.f32 %v581, %v108
  %v584 = vmul.f32 %v582, %v582
  %v585 = vmul.f32 %v583, %v583
  %586 = vadd.xlane.f32.xlu0 %v584
  %v587 = vpop.xlane.xlu0 %586
  %588 = vadd.xlane.f32.xlu0 %v585
  %v589 = vpop.xlane.xlu0 %588
  %v590 = vmax.f32 %v587, 1e-24
  %v591 = vmax.f32 %v589, 1e-24
  %v592 = vrsqrt.pop %v590
  %v593 = vrsqrt.pop %v591
  %v594 = vmul.f32 %v582, %v592
  %v595 = vmul.f32 %v583, %v593
  %v596 = vpack.c.bf16 %v595, %v594
  %v598 = vunpack.c.l.b16 %v596
  %v599 = vunpack.c.h.b16 %v596
  %v600 = vpack.c.b16 %v598, %v598
  %v601 = vpack.c.b16 %v599, %v599
  %604 = vst [vmem:[%s8] sm:$0xf] %v600
  %605 = vst [vmem:[%s8 + $0x4] sm:$0xf] %v601
  // Predicated region
  $region34: #{course_forward_pallas.1} parent=0 // pred_check
    _
  $region35: #{course_forward_pallas.1} parent=0 // pred_check_branch
    %607 = sbr.rel (0) target = $region37
  $region36: #{course_forward_pallas.1} parent=0 // pred_region
    _
  $region37: #{course_forward_pallas.1} parent=0 // pred_fallthru
    _
  // Predicated region
  $region38: #{course_forward_pallas.1} parent=0 // pred_check
    _
  $region39: #{course_forward_pallas.1} parent=0 // pred_check_branch
    %609 = sbr.rel (0) target = $region41
  $region40: #{course_forward_pallas.1} parent=0 // pred_region
    _
  $region41: #{course_forward_pallas.1} parent=0 // pred_fallthru
    _

</llo_original>
